<compile_context>
chip_gen: v7x
topology: tpu7x:2x2x1
jax: 0.10.0
libtpu: 0.0.40
codegen_flags: <defaults>
</compile_context>

<pallas_src>
import functools

import numpy as np

import jax
import jax.numpy as jnp
from jax.experimental import pallas as pl
from jax.experimental.pallas import tpu as pltpu


_CLIP_MEAN = (0.48145466, 0.4578275, 0.40821073)
_CLIP_STD = (0.26862954, 0.26130258, 0.27577711)

_CLIP_BLOCK_BYTES = 4 * 1024 * 1024   # ~4 MiB streaming tiles (double-buffered)
_IN_BLOCK_BYTES = 2 * 1024 * 1024     # ~2 MiB row tiles for the norm reduction
_VMEM_LIMIT_BYTES = 32 * 1024 * 1024  # explicit bound; headroom on 64 MiB v7x


def _round_down(x: int, m: int) -> int:
    return max(m, (x // m) * m)


# ---------------------------------------------------------------------------
# Kernel 1: CLIP preprocessing normalization  out = x * (1/std) + (-mean/std)
# ---------------------------------------------------------------------------
def _clip_norm_kernel(x_ref, sc_ref, sh_ref, o_ref):
    # x_ref / o_ref: (B*C, lane_block); sc_ref / sh_ref: (B*C, 1) f32 columns.
    # One lane-broadcast fused multiply-add per element; fully memory-bound.
    x = x_ref[...].astype(jnp.float32)
    o_ref[...] = (x * sc_ref[...] + sh_ref[...]).astype(o_ref.dtype)


def clip_preprocess_pallas(images: jax.Array) -> jax.Array:
    """images: (B, C=3, H, W) in [0, 1].  Returns (B, C, H, W), same dtype."""
    B, C, H, W = images.shape
    assert C <= len(_CLIP_MEAN), "CLIP preprocessing expects <= 3 channels"
    rows, hw = B * C, H * W

    # Per-row (n, c) scale/shift columns are compile-time constants (the row
    # block always spans the full B*C extent, so row index == global row).
    scale_col = jnp.asarray(
        np.array([1.0 / _CLIP_STD[r % C] for r in range(rows)],
                 np.float32).reshape(rows, 1))
    shift_col = jnp.asarray(
        np.array([-_CLIP_MEAN[r % C] / _CLIP_STD[r % C] for r in range(rows)],
                 np.float32).reshape(rows, 1))

    x2d = images.reshape(rows, hw)

    # Full row extent per block (B*C is small); tile the lane axis into ~4 MiB
    # blocks so BlockSpec double-buffers HBM<->VMEM and the "parallel" grid
    # axis shards across both TensorCores on v7x.
    itemsize = jnp.dtype(images.dtype).itemsize
    lane_block = _round_down(_CLIP_BLOCK_BYTES // max(1, rows * itemsize), 128)
    if lane_block >= hw:
        lane_block = hw
        grid = (1,)
    else:
        grid = (pl.cdiv(hw, lane_block),)   # ragged last block: OOB writes dropped

    out = pl.pallas_call(
        _clip_norm_kernel,
        out_shape=jax.ShapeDtypeStruct((rows, hw), images.dtype),
        grid=grid,
        in_specs=[
            pl.BlockSpec((rows, lane_block), lambda j: (0, j)),
            pl.BlockSpec((rows, 1), lambda j: (0, 0)),
            pl.BlockSpec((rows, 1), lambda j: (0, 0)),
        ],
        out_specs=pl.BlockSpec((rows, lane_block), lambda j: (0, j)),
        compiler_params=pltpu.CompilerParams(
            dimension_semantics=("parallel",),
            vmem_limit_bytes=_VMEM_LIMIT_BYTES),
    )(x2d, scale_col, shift_col)
    return out.reshape(B, C, H, W)


# ---------------------------------------------------------------------------
# Kernel 2: InstanceNorm2d(256, affine=False), eps = 1e-5 (PyTorch default)
# ---------------------------------------------------------------------------
def _instance_norm_kernel(x_ref, o_ref, *, eps: float):
    # x_ref: (rows_per_block, H*W); each row is one (n, c) instance.
    x = x_ref[...].astype(jnp.float32)
    inv_hw = 1.0 / x.shape[-1]
    mean = jnp.sum(x, axis=-1, keepdims=True) * inv_hw
    ex2 = jnp.sum(x * x, axis=-1, keepdims=True) * inv_hw
    var = jnp.maximum(ex2 - mean * mean, 0.0)          # single-pass, f32 accum
    o_ref[...] = ((x - mean) * jax.lax.rsqrt(var + eps)).astype(o_ref.dtype)


def _instance_norm_packed_kernel(x_ref, o_ref, *, hw: int, k: int, eps: float):
    # x_ref: (rows_per_block, k*hw); each row packs k (n, c) instances so the
    # lane extent is a dense multiple of 128 (unmasked vst) even when hw < 128.
    x = x_ref[...].astype(jnp.float32)
    # Segment masks only vary along the lane axis -> build them on (1, lanes)
    # and broadcast, instead of full-tile iota / compares.
    lane = jax.lax.broadcasted_iota(jnp.int32, (1, x.shape[-1]), 1)
    inv_hw = 1.0 / hw
    mean_b = jnp.zeros_like(x)
    ex2_b = jnp.zeros_like(x)
    for s in range(k):                 # k = 128 // hw, small static unroll
        in_seg = jnp.logical_and(lane >= s * hw, lane < (s + 1) * hw)
        xs = jnp.where(in_seg, x, 0.0)
        m = jnp.sum(xs, axis=-1, keepdims=True) * inv_hw
        e2 = jnp.sum(xs * xs, axis=-1, keepdims=True) * inv_hw
        mean_b = jnp.where(in_seg, m, mean_b)
        ex2_b = jnp.where(in_seg, e2, ex2_b)
    var = jnp.maximum(ex2_b - mean_b * mean_b, 0.0)
    o_ref[...] = ((x - mean_b) * jax.lax.rsqrt(var + eps)).astype(o_ref.dtype)


def instance_norm_pallas(x: jax.Array, eps: float = 1e-5) -> jax.Array:
    """x: (N, C, H, W).  Per-(N, C) normalization over H*W; dtype-preserving."""
    N, C, H, W = x.shape
    rows, hw = N * C, H * W

    # Lane-dense packing for small spatial grids (e.g. 8x8 = 64): pack
    # k = 128 // hw instances per packed row -> lane extent exactly 128.
    if hw < 128 and 128 % hw == 0 and rows % (128 // hw) == 0:
        k = 128 // hw
    else:
        k = 1
    p_rows = rows // k
    p_lanes = hw * k
    x2d = x.reshape(p_rows, p_lanes)   # pure contiguous reshape (free)

    # Row-block sizing: ~2 MiB per tile (amortizes the ~0.35 us per-grid-step
    # overhead, stays well inside v7x's 64 MiB VMEM with double-buffering).
    itemsize = jnp.dtype(x.dtype).itemsize
    rpb = _round_down(_IN_BLOCK_BYTES // max(1, p_lanes * itemsize), 8)
    if rpb >= p_rows:
        rpb = p_rows                   # full row extent (any row count allowed)
        grid = (1,)
    else:
        grid = (pl.cdiv(p_rows, rpb),)  # ragged last block: OOB writes dropped

    if k == 1:
        kern = functools.partial(_instance_norm_kernel, eps=eps)
    else:
        kern = functools.partial(_instance_norm_packed_kernel, hw=hw, k=k, eps=eps)

    out = pl.pallas_call(
        kern,
        out_shape=jax.ShapeDtypeStruct((p_rows, p_lanes), x.dtype),
        grid=grid,
        in_specs=[pl.BlockSpec((rpb, p_lanes), lambda i: (i, 0))],
        out_specs=pl.BlockSpec((rpb, p_lanes), lambda i: (i, 0)),
        compiler_params=pltpu.CompilerParams(
            dimension_semantics=("parallel",),
            vmem_limit_bytes=_VMEM_LIMIT_BYTES),
    )(x2d)
    return out.reshape(N, C, H, W)


# ---------------------------------------------------------------------------
# Forward wrapper mirroring GenericHOINetwork.forward (CLIP_ViT_* branch)
# ---------------------------------------------------------------------------
@jax.jit
def generic_hoi_network_forward(images: jax.Array, backbone_features: jax.Array):
    """
    images:            (B, 3, H, W) raw images in [0, 1]
    backbone_features: (B, 256, h, w) stand-in for the (external) backbone
                       output on which the module's InstanceNorm2d(256) acts.
    Returns (preprocessed_images, normalized_features).
    """
    processed = clip_preprocess_pallas(images)          # preprocess() hot path
    # TODO(synk): self.backbone / self.interaction_head are external modules.
    feats = instance_norm_pallas(backbone_features)     # InstanceNorm2d(256)
    return processed, feats


# ---------------------------------------------------------------------------
# Reference (plain JAX) for validation
# ---------------------------------------------------------------------------
def _reference(images, feats):
    mean = jnp.array(_CLIP_MEAN, jnp.float32).reshape(1, 3, 1, 1)
    std = jnp.array(_CLIP_STD, jnp.float32).reshape(1, 3, 1, 1)
    proc = (images - mean) / std
    m = jnp.mean(feats, axis=(2, 3), keepdims=True)
    v = jnp.mean((feats - m) ** 2, axis=(2, 3), keepdims=True)
    fn = (feats - m) / jnp.sqrt(v + 1e-5)
    return proc, fn


if __name__ == "__main__":
    key = jax.random.PRNGKey(0)
    k1, k2 = jax.random.split(key)
    # Small shapes: batch=2, image 3x16x16, backbone feature map 256x8x8.
    images = jax.random.uniform(k1, (2, 3, 16, 16), dtype=jnp.float32)
    features = jax.random.normal(k2, (2, 256, 8, 8), dtype=jnp.float32)

    proc, fnorm = generic_hoi_network_forward(images, features)
    jax.block_until_ready((proc, fnorm))

    ref_proc, ref_fnorm = _reference(images, features)
    assert jnp.allclose(proc, ref_proc, atol=1e-5, rtol=1e-5)
    assert jnp.allclose(fnorm, ref_fnorm, atol=1e-4, rtol=1e-4)

    print("KERNEL_OK")
</pallas_src>

<mosaic_0001>
module attributes {stable_mosaic.version = 11 : i64} {
  func.func @_instance_norm_packed_kernel(%arg0: i32, %arg1: memref<256x128xf32, #tpu.memory_space<vmem>>, %arg2: memref<256x128xf32, #tpu.memory_space<vmem>>) attributes {dimension_semantics = [#tpu.dimension_semantics<parallel>], iteration_bounds = array<i64: 1>, scalar_prefetch = 0 : i64, scratch_operands = 0 : i64, tpu.core_type = #tpu.core_type<tc>, window_params = [{transform_indices = @transform_0, window_bounds = array<i64: 256, 128>}, {transform_indices = @transform_1, window_bounds = array<i64: 256, 128>}]} {
    %c0 = arith.constant 0 : index
    %c0_0 = arith.constant 0 : index
    %0 = vector.load %arg1[%c0, %c0_0] : memref<256x128xf32, #tpu.memory_space<vmem>>, vector<256x128xf32>
    %1 = tpu.iota {dimensions = array<i32: 1>} : vector<1x128xi32>
    %cst = arith.constant 0.000000e+00 : f32
    %2 = vector.broadcast %cst : f32 to vector<256x128xf32>
    %cst_1 = arith.constant 0.000000e+00 : f32
    %3 = vector.broadcast %cst_1 : f32 to vector<256x128xf32>
    %c0_i32 = arith.constant 0 : i32
    %4 = vector.broadcast %c0_i32 : i32 to vector<1x128xi32>
    %5 = arith.cmpi sge, %1, %4 : vector<1x128xi32>
    %c64_i32 = arith.constant 64 : i32
    %6 = vector.broadcast %c64_i32 : i32 to vector<1x128xi32>
    %7 = arith.cmpi slt, %1, %6 : vector<1x128xi32>
    %8 = arith.andi %5, %7 : vector<1x128xi1>
    %cst_2 = arith.constant 0.000000e+00 : f32
    %9 = vector.shape_cast %8 : vector<1x128xi1> to vector<1x128xi1>
    %10 = vector.broadcast %9 : vector<1x128xi1> to vector<256x128xi1>
    %11 = vector.broadcast %cst_2 : f32 to vector<256x128xf32>
    %12 = arith.select %10, %0, %11 : vector<256x128xi1>, vector<256x128xf32>
    %cst_3 = arith.constant dense<0.000000e+00> : vector<256xf32>
    %13 = vector.multi_reduction <add>, %12, %cst_3 [1] : vector<256x128xf32> to vector<256xf32>
    %14 = vector.shape_cast %13 : vector<256xf32> to vector<256x1xf32>
    %cst_4 = arith.constant 1.562500e-02 : f32
    %15 = vector.broadcast %cst_4 : f32 to vector<256x1xf32>
    %16 = arith.mulf %14, %15 : vector<256x1xf32>
    %17 = arith.mulf %12, %12 : vector<256x128xf32>
    %cst_5 = arith.constant dense<0.000000e+00> : vector<256xf32>
    %18 = vector.multi_reduction <add>, %17, %cst_5 [1] : vector<256x128xf32> to vector<256xf32>
    %19 = vector.shape_cast %18 : vector<256xf32> to vector<256x1xf32>
    %cst_6 = arith.constant 1.562500e-02 : f32
    %20 = vector.broadcast %cst_6 : f32 to vector<256x1xf32>
    %21 = arith.mulf %19, %20 : vector<256x1xf32>
    %22 = vector.shape_cast %8 : vector<1x128xi1> to vector<1x128xi1>
    %23 = vector.broadcast %22 : vector<1x128xi1> to vector<256x128xi1>
    %24 = vector.shape_cast %16 : vector<256x1xf32> to vector<256x1xf32>
    %25 = vector.broadcast %24 : vector<256x1xf32> to vector<256x128xf32>
    %26 = arith.select %23, %25, %2 : vector<256x128xi1>, vector<256x128xf32>
    %27 = vector.shape_cast %8 : vector<1x128xi1> to vector<1x128xi1>
    %28 = vector.broadcast %27 : vector<1x128xi1> to vector<256x128xi1>
    %29 = vector.shape_cast %21 : vector<256x1xf32> to vector<256x1xf32>
    %30 = vector.broadcast %29 : vector<256x1xf32> to vector<256x128xf32>
    %31 = arith.select %28, %30, %3 : vector<256x128xi1>, vector<256x128xf32>
    %c64_i32_7 = arith.constant 64 : i32
    %32 = vector.broadcast %c64_i32_7 : i32 to vector<1x128xi32>
    %33 = arith.cmpi sge, %1, %32 : vector<1x128xi32>
    %c128_i32 = arith.constant 128 : i32
    %34 = vector.broadcast %c128_i32 : i32 to vector<1x128xi32>
    %35 = arith.cmpi slt, %1, %34 : vector<1x128xi32>
    %36 = arith.andi %33, %35 : vector<1x128xi1>
    %cst_8 = arith.constant 0.000000e+00 : f32
    %37 = vector.shape_cast %36 : vector<1x128xi1> to vector<1x128xi1>
    %38 = vector.broadcast %37 : vector<1x128xi1> to vector<256x128xi1>
    %39 = vector.broadcast %cst_8 : f32 to vector<256x128xf32>
    %40 = arith.select %38, %0, %39 : vector<256x128xi1>, vector<256x128xf32>
    %cst_9 = arith.constant dense<0.000000e+00> : vector<256xf32>
    %41 = vector.multi_reduction <add>, %40, %cst_9 [1] : vector<256x128xf32> to vector<256xf32>
    %42 = vector.shape_cast %41 : vector<256xf32> to vector<256x1xf32>
    %cst_10 = arith.constant 1.562500e-02 : f32
    %43 = vector.broadcast %cst_10 : f32 to vector<256x1xf32>
    %44 = arith.mulf %42, %43 : vector<256x1xf32>
    %45 = arith.mulf %40, %40 : vector<256x128xf32>
    %cst_11 = arith.constant dense<0.000000e+00> : vector<256xf32>
    %46 = vector.multi_reduction <add>, %45, %cst_11 [1] : vector<256x128xf32> to vector<256xf32>
    %47 = vector.shape_cast %46 : vector<256xf32> to vector<256x1xf32>
    %cst_12 = arith.constant 1.562500e-02 : f32
    %48 = vector.broadcast %cst_12 : f32 to vector<256x1xf32>
    %49 = arith.mulf %47, %48 : vector<256x1xf32>
    %50 = vector.shape_cast %36 : vector<1x128xi1> to vector<1x128xi1>
    %51 = vector.broadcast %50 : vector<1x128xi1> to vector<256x128xi1>
    %52 = vector.shape_cast %44 : vector<256x1xf32> to vector<256x1xf32>
    %53 = vector.broadcast %52 : vector<256x1xf32> to vector<256x128xf32>
    %54 = arith.select %51, %53, %26 : vector<256x128xi1>, vector<256x128xf32>
    %55 = vector.shape_cast %36 : vector<1x128xi1> to vector<1x128xi1>
    %56 = vector.broadcast %55 : vector<1x128xi1> to vector<256x128xi1>
    %57 = vector.shape_cast %49 : vector<256x1xf32> to vector<256x1xf32>
    %58 = vector.broadcast %57 : vector<256x1xf32> to vector<256x128xf32>
    %59 = arith.select %56, %58, %31 : vector<256x128xi1>, vector<256x128xf32>
    %60 = arith.mulf %54, %54 : vector<256x128xf32>
    %61 = arith.subf %59, %60 : vector<256x128xf32>
    %cst_13 = arith.constant 0.000000e+00 : f32
    %62 = vector.broadcast %cst_13 : f32 to vector<256x128xf32>
    %63 = arith.maximumf %61, %62 : vector<256x128xf32>
    %64 = arith.subf %0, %54 : vector<256x128xf32>
    %cst_14 = arith.constant 9.99999974E-6 : f32
    %65 = vector.broadcast %cst_14 : f32 to vector<256x128xf32>
    %66 = arith.addf %63, %65 : vector<256x128xf32>
    %67 = math.rsqrt %66 : vector<256x128xf32>
    %68 = arith.mulf %64, %67 : vector<256x128xf32>
    %c0_15 = arith.constant 0 : index
    %c0_16 = arith.constant 0 : index
    %69 = vector.load %arg2[%c0_15, %c0_16] : memref<256x128xf32, #tpu.memory_space<vmem>>, vector<256x128xf32>
    tpu.vector_store %arg2[%c0_15, %c0_16], %68 {strides = array<i32>} : memref<256x128xf32, #tpu.memory_space<vmem>>, vector<256x128xf32>,
    return
  }
  func.func @transform_0(%arg0: i32) -> (i32, i32) {
    %c0_i32 = arith.constant 0 : i32
    %c0_i32_0 = arith.constant 0 : i32
    return %arg0, %c0_i32 : i32, i32
  }
  func.func @transform_1(%arg0: i32) -> (i32, i32) {
    %c0_i32 = arith.constant 0 : i32
    %c0_i32_0 = arith.constant 0 : i32
    return %arg0, %c0_i32 : i32, i32
  }
}

module attributes {stable_mosaic.version = 11 : i64} {
  func.func @_clip_norm_kernel(%arg0: i32, %arg1: memref<6x256xf32, #tpu.memory_space<vmem>>, %arg2: memref<6x1xf32, #tpu.memory_space<vmem>>, %arg3: memref<6x1xf32, #tpu.memory_space<vmem>>, %arg4: memref<6x256xf32, #tpu.memory_space<vmem>>) attributes {dimension_semantics = [#tpu.dimension_semantics<parallel>], iteration_bounds = array<i64: 1>, scalar_prefetch = 0 : i64, scratch_operands = 0 : i64, tpu.core_type = #tpu.core_type<tc>, window_params = [{transform_indices = @transform_0, window_bounds = array<i64: 6, 256>}, {pipeline_mode = #tpu.pipeline_mode<synchronous>, transform_indices = @transform_1, window_bounds = array<i64: 6, 1>}, {pipeline_mode = #tpu.pipeline_mode<synchronous>, transform_indices = @transform_2, window_bounds = array<i64: 6, 1>}, {transform_indices = @transform_3, window_bounds = array<i64: 6, 256>}]} {
    %c0 = arith.constant 0 : index
    %c0_0 = arith.constant 0 : index
    %0 = vector.load %arg1[%c0, %c0_0] : memref<6x256xf32, #tpu.memory_space<vmem>>, vector<6x256xf32>
    %c0_1 = arith.constant 0 : index
    %c0_2 = arith.constant 0 : index
    %1 = vector.load %arg2[%c0_1, %c0_2] : memref<6x1xf32, #tpu.memory_space<vmem>>, vector<6x1xf32>
    %2 = vector.broadcast %1 : vector<6x1xf32> to vector<6x256xf32>
    %3 = arith.mulf %0, %2 : vector<6x256xf32>
    %c0_3 = arith.constant 0 : index
    %c0_4 = arith.constant 0 : index
    %4 = vector.load %arg3[%c0_3, %c0_4] : memref<6x1xf32, #tpu.memory_space<vmem>>, vector<6x1xf32>
    %5 = vector.broadcast %4 : vector<6x1xf32> to vector<6x256xf32>
    %6 = arith.addf %3, %5 : vector<6x256xf32>
    %c0_5 = arith.constant 0 : index
    %c0_6 = arith.constant 0 : index
    %7 = vector.load %arg4[%c0_5, %c0_6] : memref<6x256xf32, #tpu.memory_space<vmem>>, vector<6x256xf32>
    tpu.vector_store %arg4[%c0_5, %c0_6], %6 {strides = array<i32>} : memref<6x256xf32, #tpu.memory_space<vmem>>, vector<6x256xf32>,
    return
  }
  func.func @transform_0(%arg0: i32) -> (i32, i32) {
    %c0_i32 = arith.constant 0 : i32
    %c0_i32_0 = arith.constant 0 : i32
    return %c0_i32, %arg0 : i32, i32
  }
  func.func @transform_1(%arg0: i32) -> (i32, i32) {
    %c0_i32 = arith.constant 0 : i32
    %c0_i32_0 = arith.constant 0 : i32
    %c0_i32_1 = arith.constant 0 : i32
    return %c0_i32, %c0_i32_0 : i32, i32
  }
  func.func @transform_2(%arg0: i32) -> (i32, i32) {
    %c0_i32 = arith.constant 0 : i32
    %c0_i32_0 = arith.constant 0 : i32
    %c0_i32_1 = arith.constant 0 : i32
    return %c0_i32, %c0_i32_0 : i32, i32
  }
  func.func @transform_3(%arg0: i32) -> (i32, i32) {
    %c0_i32 = arith.constant 0 : i32
    %c0_i32_0 = arith.constant 0 : i32
    return %c0_i32, %arg0 : i32, i32
  }
}

</mosaic_0001>

<llo_original>
// kernel: generic_hoi_network_forward.3
$region0: #{generic_hoi_network_forward.3}
  #allocation0 [shape = 'u32[]', space=smem, size = 0x4, offset = 0x4, fixed_abs, tag = 'smem constant byte address 0x4 - core index']
  #allocation1 [shape = 'u32[144,128]{1,0:T(1,128)}', space=vmem, size = 0x12000, scoped, tag = 'internal scratch']
  %s0 = inlined_call_operand.vmem [shape: f32[256,128], index: 0, kind: input, shape index: {}]
  %s1 = inlined_call_operand.vmem [shape: f32[256,128], index: 1, kind: output, shape index: {}]
  %s2 = sld [smem:[#allocation0]]
  $region14: #{generic_hoi_network_forward.3} parent=0
    _
  %s4 = ssub.s32 1, %s2
  %s5 = scalar_select 0, %s4, %s2
  // Predicated region
  $region2: #{generic_hoi_network_forward.3} parent=0 // pred_check
    _
  $region3: #{generic_hoi_network_forward.3} parent=0 // pred_check_branch
    %7 = sbr.rel (0) target = $region5
  $region4: #{generic_hoi_network_forward.3} parent=0 // pred_region
    _
  $region5: #{generic_hoi_network_forward.3} parent=0 // pred_fallthru
    _
  %v8 = vld [vmem:[%s0] sm:$0xff]
  %v9 = vld [vmem:[%s0 + $0x8] sm:$0xff]
  %v10 = vld [vmem:[%s0 + $0x10] sm:$0xff]
  %v11 = vld [vmem:[%s0 + $0x18] sm:$0xff]
  %v12 = vld [vmem:[%s0 + $0x20] sm:$0xff]
  %v13 = vld [vmem:[%s0 + $0x28] sm:$0xff]
  %v14 = vld [vmem:[%s0 + $0x30] sm:$0xff]
  %v15 = vld [vmem:[%s0 + $0x38] sm:$0xff]
  %v16 = vld [vmem:[%s0 + $0x40] sm:$0xff]
  %v17 = vld [vmem:[%s0 + $0x48] sm:$0xff]
  %v18 = vld [vmem:[%s0 + $0x50] sm:$0xff]
  %v19 = vld [vmem:[%s0 + $0x58] sm:$0xff]
  %v20 = vld [vmem:[%s0 + $0x60] sm:$0xff]
  %v21 = vld [vmem:[%s0 + $0x68] sm:$0xff]
  %v22 = vld [vmem:[%s0 + $0x70] sm:$0xff]
  %v23 = vld [vmem:[%s0 + $0x78] sm:$0xff]
  %v24 = vld [vmem:[%s0 + $0x80] sm:$0xff]
  %v25 = vld [vmem:[%s0 + $0x88] sm:$0xff]
  %v26 = vld [vmem:[%s0 + $0x90] sm:$0xff]
  %v27 = vld [vmem:[%s0 + $0x98] sm:$0xff]
  %v28 = vld [vmem:[%s0 + $0xa0] sm:$0xff]
  %v29 = vld [vmem:[%s0 + $0xa8] sm:$0xff]
  %v30 = vld [vmem:[%s0 + $0xb0] sm:$0xff]
  %v31 = vld [vmem:[%s0 + $0xb8] sm:$0xff]
  %v32 = vld [vmem:[%s0 + $0xc0] sm:$0xff]
  %v33 = vld [vmem:[%s0 + $0xc8] sm:$0xff]
  %v34 = vld [vmem:[%s0 + $0xd0] sm:$0xff]
  %v35 = vld [vmem:[%s0 + $0xd8] sm:$0xff]
  %v36 = vld [vmem:[%s0 + $0xe0] sm:$0xff]
  %v37 = vld [vmem:[%s0 + $0xe8] sm:$0xff]
  %v38 = vld [vmem:[%s0 + $0xf0] sm:$0xff]
  %v39 = vld [vmem:[%s0 + $0xf8] sm:$0xff]
  %v40 = vlaneseq
  %v41 = vand.u32 %v40, 127
  %vm42 = vcmp.ge.s32.totalorder %v41, 0
  %vm43 = vcmp.lt.s32.totalorder %v41, 64
  %vm44 = vmand %vm42, %vm43
  %v45 = vsel %vm44, 1, 0
  %vm46 = vcmp.eq.s32.totalorder %v45, 1
  %v47 = vsel %vm46, %v8, 0.0
  %v48 = vsel %vm46, %v9, 0.0
  %v49 = vsel %vm46, %v10, 0.0
  %v50 = vsel %vm46, %v11, 0.0
  %v51 = vsel %vm46, %v12, 0.0
  %v52 = vsel %vm46, %v13, 0.0
  %v53 = vsel %vm46, %v14, 0.0
  %v54 = vsel %vm46, %v15, 0.0
  %v55 = vsel %vm46, %v16, 0.0
  %v56 = vsel %vm46, %v17, 0.0
  %v57 = vsel %vm46, %v18, 0.0
  %v58 = vsel %vm46, %v19, 0.0
  %v59 = vsel %vm46, %v20, 0.0
  %v60 = vsel %vm46, %v21, 0.0
  %v61 = vsel %vm46, %v22, 0.0
  %v62 = vsel %vm46, %v23, 0.0
  %v63 = vsel %vm46, %v24, 0.0
  %v64 = vsel %vm46, %v25, 0.0
  %v65 = vsel %vm46, %v26, 0.0
  %v66 = vsel %vm46, %v27, 0.0
  %v67 = vsel %vm46, %v28, 0.0
  %v68 = vsel %vm46, %v29, 0.0
  %v69 = vsel %vm46, %v30, 0.0
  %v70 = vsel %vm46, %v31, 0.0
  %v71 = vsel %vm46, %v32, 0.0
  %v72 = vsel %vm46, %v33, 0.0
  %v73 = vsel %vm46, %v34, 0.0
  %v74 = vsel %vm46, %v35, 0.0
  %v75 = vsel %vm46, %v36, 0.0
  %v76 = vsel %vm46, %v37, 0.0
  %v77 = vsel %vm46, %v38, 0.0
  %v78 = vsel %vm46, %v39, 0.0
  %79 = vadd.xlane.f32.xlu0 %v47
  %v80 = vpop.xlane.xlu0 %79
  %81 = vadd.xlane.f32.xlu0 %v48
  %v82 = vpop.xlane.xlu0 %81
  %83 = vadd.xlane.f32.xlu0 %v49
  %v84 = vpop.xlane.xlu0 %83
  %85 = vadd.xlane.f32.xlu0 %v50
  %v86 = vpop.xlane.xlu0 %85
  %87 = vadd.xlane.f32.xlu0 %v51
  %v88 = vpop.xlane.xlu0 %87
  %89 = vadd.xlane.f32.xlu0 %v52
  %v90 = vpop.xlane.xlu0 %89
  %91 = vadd.xlane.f32.xlu0 %v53
  %v92 = vpop.xlane.xlu0 %91
  %93 = vadd.xlane.f32.xlu0 %v54
  %v94 = vpop.xlane.xlu0 %93
  %95 = vadd.xlane.f32.xlu0 %v55
  %v96 = vpop.xlane.xlu0 %95
  %97 = vadd.xlane.f32.xlu0 %v56
  %v98 = vpop.xlane.xlu0 %97
  %99 = vadd.xlane.f32.xlu0 %v57
  %v100 = vpop.xlane.xlu0 %99
  %101 = vadd.xlane.f32.xlu0 %v58
  %v102 = vpop.xlane.xlu0 %101
  %103 = vadd.xlane.f32.xlu0 %v59
  %v104 = vpop.xlane.xlu0 %103
  %105 = vadd.xlane.f32.xlu0 %v60
  %v106 = vpop.xlane.xlu0 %105
  %107 = vadd.xlane.f32.xlu0 %v61
  %v108 = vpop.xlane.xlu0 %107
  %109 = vadd.xlane.f32.xlu0 %v62
  %v110 = vpop.xlane.xlu0 %109
  %111 = vadd.xlane.f32.xlu0 %v63
  %v112 = vpop.xlane.xlu0 %111
  %113 = vadd.xlane.f32.xlu0 %v64
  %v114 = vpop.xlane.xlu0 %113
  %115 = vadd.xlane.f32.xlu0 %v65
  %v116 = vpop.xlane.xlu0 %115
  %117 = vadd.xlane.f32.xlu0 %v66
  %v118 = vpop.xlane.xlu0 %117
  %119 = vadd.xlane.f32.xlu0 %v67
  %v120 = vpop.xlane.xlu0 %119
  %121 = vadd.xlane.f32.xlu0 %v68
  %v122 = vpop.xlane.xlu0 %121
  %123 = vadd.xlane.f32.xlu0 %v69
  %v124 = vpop.xlane.xlu0 %123
  %125 = vadd.xlane.f32.xlu0 %v70
  %v126 = vpop.xlane.xlu0 %125
  %127 = vadd.xlane.f32.xlu0 %v71
  %v128 = vpop.xlane.xlu0 %127
  %129 = vadd.xlane.f32.xlu0 %v72
  %v130 = vpop.xlane.xlu0 %129
  %131 = vadd.xlane.f32.xlu0 %v73
  %v132 = vpop.xlane.xlu0 %131
  %133 = vadd.xlane.f32.xlu0 %v74
  %v134 = vpop.xlane.xlu0 %133
  %135 = vadd.xlane.f32.xlu0 %v75
  %v136 = vpop.xlane.xlu0 %135
  %137 = vadd.xlane.f32.xlu0 %v76
  %v138 = vpop.xlane.xlu0 %137
  %139 = vadd.xlane.f32.xlu0 %v77
  %v140 = vpop.xlane.xlu0 %139
  %141 = vadd.xlane.f32.xlu0 %v78
  %v142 = vpop.xlane.xlu0 %141
  %v143 = vmul.f32 %v80, 0.015625
  %v144 = vmul.f32 %v82, 0.015625
  %v145 = vmul.f32 %v84, 0.015625
  %v146 = vmul.f32 %v86, 0.015625
  %v147 = vmul.f32 %v88, 0.015625
  %v148 = vmul.f32 %v90, 0.015625
  %v149 = vmul.f32 %v92, 0.015625
  %v150 = vmul.f32 %v94, 0.015625
  %v151 = vmul.f32 %v96, 0.015625
  %v152 = vmul.f32 %v98, 0.015625
  %v153 = vmul.f32 %v100, 0.015625
  %v154 = vmul.f32 %v102, 0.015625
  %v155 = vmul.f32 %v104, 0.015625
  %v156 = vmul.f32 %v106, 0.015625
  %v157 = vmul.f32 %v108, 0.015625
  %v158 = vmul.f32 %v110, 0.015625
  %v159 = vmul.f32 %v112, 0.015625
  %v160 = vmul.f32 %v114, 0.015625
  %v161 = vmul.f32 %v116, 0.015625
  %v162 = vmul.f32 %v118, 0.015625
  %v163 = vmul.f32 %v120, 0.015625
  %v164 = vmul.f32 %v122, 0.015625
  %v165 = vmul.f32 %v124, 0.015625
  %v166 = vmul.f32 %v126, 0.015625
  %v167 = vmul.f32 %v128, 0.015625
  %v168 = vmul.f32 %v130, 0.015625
  %v169 = vmul.f32 %v132, 0.015625
  %v170 = vmul.f32 %v134, 0.015625
  %v171 = vmul.f32 %v136, 0.015625
  %v172 = vmul.f32 %v138, 0.015625
  %v173 = vmul.f32 %v140, 0.015625
  %v174 = vmul.f32 %v142, 0.015625
  %v175 = vmul.f32 %v47, %v47
  %v176 = vmul.f32 %v48, %v48
  %v177 = vmul.f32 %v49, %v49
  %v178 = vmul.f32 %v50, %v50
  %v179 = vmul.f32 %v51, %v51
  %v180 = vmul.f32 %v52, %v52
  %v181 = vmul.f32 %v53, %v53
  %v182 = vmul.f32 %v54, %v54
  %v183 = vmul.f32 %v55, %v55
  %v184 = vmul.f32 %v56, %v56
  %v185 = vmul.f32 %v57, %v57
  %v186 = vmul.f32 %v58, %v58
  %v187 = vmul.f32 %v59, %v59
  %v188 = vmul.f32 %v60, %v60
  %v189 = vmul.f32 %v61, %v61
  %v190 = vmul.f32 %v62, %v62
  %v191 = vmul.f32 %v63, %v63
  %v192 = vmul.f32 %v64, %v64
  %v193 = vmul.f32 %v65, %v65
  %v194 = vmul.f32 %v66, %v66
  %v195 = vmul.f32 %v67, %v67
  %v196 = vmul.f32 %v68, %v68
  %v197 = vmul.f32 %v69, %v69
  %v198 = vmul.f32 %v70, %v70
  %v199 = vmul.f32 %v71, %v71
  %v200 = vmul.f32 %v72, %v72
  %v201 = vmul.f32 %v73, %v73
  %v202 = vmul.f32 %v74, %v74
  %v203 = vmul.f32 %v75, %v75
  %v204 = vmul.f32 %v76, %v76
  %v205 = vmul.f32 %v77, %v77
  %v206 = vmul.f32 %v78, %v78
  %207 = vadd.xlane.f32.xlu0 %v175
  %v208 = vpop.xlane.xlu0 %207
  %209 = vadd.xlane.f32.xlu0 %v176
  %v210 = vpop.xlane.xlu0 %209
  %211 = vadd.xlane.f32.xlu0 %v177
  %v212 = vpop.xlane.xlu0 %211
  %213 = vadd.xlane.f32.xlu0 %v178
  %v214 = vpop.xlane.xlu0 %213
  %215 = vadd.xlane.f32.xlu0 %v179
  %v216 = vpop.xlane.xlu0 %215
  %217 = vadd.xlane.f32.xlu0 %v180
  %v218 = vpop.xlane.xlu0 %217
  %219 = vadd.xlane.f32.xlu0 %v181
  %v220 = vpop.xlane.xlu0 %219
  %221 = vadd.xlane.f32.xlu0 %v182
  %v222 = vpop.xlane.xlu0 %221
  %223 = vadd.xlane.f32.xlu0 %v183
  %v224 = vpop.xlane.xlu0 %223
  %225 = vadd.xlane.f32.xlu0 %v184
  %v226 = vpop.xlane.xlu0 %225
  %227 = vadd.xlane.f32.xlu0 %v185
  %v228 = vpop.xlane.xlu0 %227
  %229 = vadd.xlane.f32.xlu0 %v186
  %v230 = vpop.xlane.xlu0 %229
  %231 = vadd.xlane.f32.xlu0 %v187
  %v232 = vpop.xlane.xlu0 %231
  %233 = vadd.xlane.f32.xlu0 %v188
  %v234 = vpop.xlane.xlu0 %233
  %235 = vadd.xlane.f32.xlu0 %v189
  %v236 = vpop.xlane.xlu0 %235
  %237 = vadd.xlane.f32.xlu0 %v190
  %v238 = vpop.xlane.xlu0 %237
  %239 = vadd.xlane.f32.xlu0 %v191
  %v240 = vpop.xlane.xlu0 %239
  %241 = vadd.xlane.f32.xlu0 %v192
  %v242 = vpop.xlane.xlu0 %241
  %243 = vadd.xlane.f32.xlu0 %v193
  %v244 = vpop.xlane.xlu0 %243
  %245 = vadd.xlane.f32.xlu0 %v194
  %v246 = vpop.xlane.xlu0 %245
  %247 = vadd.xlane.f32.xlu0 %v195
  %v248 = vpop.xlane.xlu0 %247
  %249 = vadd.xlane.f32.xlu0 %v196
  %v250 = vpop.xlane.xlu0 %249
  %251 = vadd.xlane.f32.xlu0 %v197
  %v252 = vpop.xlane.xlu0 %251
  %253 = vadd.xlane.f32.xlu0 %v198
  %v254 = vpop.xlane.xlu0 %253
  %255 = vadd.xlane.f32.xlu0 %v199
  %v256 = vpop.xlane.xlu0 %255
  %257 = vadd.xlane.f32.xlu0 %v200
  %v258 = vpop.xlane.xlu0 %257
  %259 = vadd.xlane.f32.xlu0 %v201
  %v260 = vpop.xlane.xlu0 %259
  %261 = vadd.xlane.f32.xlu0 %v202
  %v262 = vpop.xlane.xlu0 %261
  %263 = vadd.xlane.f32.xlu0 %v203
  %v264 = vpop.xlane.xlu0 %263
  %265 = vadd.xlane.f32.xlu0 %v204
  %v266 = vpop.xlane.xlu0 %265
  %267 = vadd.xlane.f32.xlu0 %v205
  %v268 = vpop.xlane.xlu0 %267
  %269 = vadd.xlane.f32.xlu0 %v206
  %v270 = vpop.xlane.xlu0 %269
  %v271 = vmul.f32 %v208, 0.015625
  %v272 = vmul.f32 %v210, 0.015625
  %v273 = vmul.f32 %v212, 0.015625
  %v274 = vmul.f32 %v214, 0.015625
  %v275 = vmul.f32 %v216, 0.015625
  %v276 = vmul.f32 %v218, 0.015625
  %v277 = vmul.f32 %v220, 0.015625
  %v278 = vmul.f32 %v222, 0.015625
  %v279 = vmul.f32 %v224, 0.015625
  %v280 = vmul.f32 %v226, 0.015625
  %v281 = vmul.f32 %v228, 0.015625
  %v282 = vmul.f32 %v230, 0.015625
  %v283 = vmul.f32 %v232, 0.015625
  %v284 = vmul.f32 %v234, 0.015625
  %v285 = vmul.f32 %v236, 0.015625
  %v286 = vmul.f32 %v238, 0.015625
  %v287 = vmul.f32 %v240, 0.015625
  %v288 = vmul.f32 %v242, 0.015625
  %v289 = vmul.f32 %v244, 0.015625
  %v290 = vmul.f32 %v246, 0.015625
  %v291 = vmul.f32 %v248, 0.015625
  %v292 = vmul.f32 %v250, 0.015625
  %v293 = vmul.f32 %v252, 0.015625
  %v294 = vmul.f32 %v254, 0.015625
  %v295 = vmul.f32 %v256, 0.015625
  %v296 = vmul.f32 %v258, 0.015625
  %v297 = vmul.f32 %v260, 0.015625
  %v298 = vmul.f32 %v262, 0.015625
  %v299 = vmul.f32 %v264, 0.015625
  %v300 = vmul.f32 %v266, 0.015625
  %v301 = vmul.f32 %v268, 0.015625
  %v302 = vmul.f32 %v270, 0.015625
  %v303 = vsel %vm46, %v143, 0.0
  %v304 = vsel %vm46, %v144, 0.0
  %v305 = vsel %vm46, %v145, 0.0
  %v306 = vsel %vm46, %v146, 0.0
  %v307 = vsel %vm46, %v147, 0.0
  %v308 = vsel %vm46, %v148, 0.0
  %v309 = vsel %vm46, %v149, 0.0
  %v310 = vsel %vm46, %v150, 0.0
  %v311 = vsel %vm46, %v151, 0.0
  %v312 = vsel %vm46, %v152, 0.0
  %v313 = vsel %vm46, %v153, 0.0
  %v314 = vsel %vm46, %v154, 0.0
  %v315 = vsel %vm46, %v155, 0.0
  %v316 = vsel %vm46, %v156, 0.0
  %v317 = vsel %vm46, %v157, 0.0
  %v318 = vsel %vm46, %v158, 0.0
  %v319 = vsel %vm46, %v159, 0.0
  %v320 = vsel %vm46, %v160, 0.0
  %v321 = vsel %vm46, %v161, 0.0
  %v322 = vsel %vm46, %v162, 0.0
  %v323 = vsel %vm46, %v163, 0.0
  %v324 = vsel %vm46, %v164, 0.0
  %v325 = vsel %vm46, %v165, 0.0
  %v326 = vsel %vm46, %v166, 0.0
  %v327 = vsel %vm46, %v167, 0.0
  %v328 = vsel %vm46, %v168, 0.0
  %v329 = vsel %vm46, %v169, 0.0
  %v330 = vsel %vm46, %v170, 0.0
  %v331 = vsel %vm46, %v171, 0.0
  %v332 = vsel %vm46, %v172, 0.0
  %v333 = vsel %vm46, %v173, 0.0
  %v334 = vsel %vm46, %v174, 0.0
  %v335 = vsel %vm46, %v271, 0.0
  %v336 = vsel %vm46, %v272, 0.0
  %v337 = vsel %vm46, %v273, 0.0
  %v338 = vsel %vm46, %v274, 0.0
  %v339 = vsel %vm46, %v275, 0.0
  %v340 = vsel %vm46, %v276, 0.0
  %v341 = vsel %vm46, %v277, 0.0
  %v342 = vsel %vm46, %v278, 0.0
  %v343 = vsel %vm46, %v279, 0.0
  %v344 = vsel %vm46, %v280, 0.0
  %v345 = vsel %vm46, %v281, 0.0
  %v346 = vsel %vm46, %v282, 0.0
  %v347 = vsel %vm46, %v283, 0.0
  %v348 = vsel %vm46, %v284, 0.0
  %v349 = vsel %vm46, %v285, 0.0
  %v350 = vsel %vm46, %v286, 0.0
  %v351 = vsel %vm46, %v287, 0.0
  %v352 = vsel %vm46, %v288, 0.0
  %v353 = vsel %vm46, %v289, 0.0
  %v354 = vsel %vm46, %v290, 0.0
  %v355 = vsel %vm46, %v291, 0.0
  %v356 = vsel %vm46, %v292, 0.0
  %v357 = vsel %vm46, %v293, 0.0
  %v358 = vsel %vm46, %v294, 0.0
  %v359 = vsel %vm46, %v295, 0.0
  %v360 = vsel %vm46, %v296, 0.0
  %v361 = vsel %vm46, %v297, 0.0
  %v362 = vsel %vm46, %v298, 0.0
  %v363 = vsel %vm46, %v299, 0.0
  %v364 = vsel %vm46, %v300, 0.0
  %v365 = vsel %vm46, %v301, 0.0
  %v366 = vsel %vm46, %v302, 0.0
  %vm367 = vcmp.ge.s32.totalorder %v41, 64
  %vm368 = vcmp.lt.s32.totalorder %v41, 128
  %vm369 = vmand %vm367, %vm368
  %v370 = vsel %vm369, 1, 0
  %vm371 = vcmp.eq.s32.totalorder %v370, 1
  %v372 = vsel %vm371, %v8, 0.0
  %v373 = vsel %vm371, %v9, 0.0
  %v374 = vsel %vm371, %v10, 0.0
  %v375 = vsel %vm371, %v11, 0.0
  %v376 = vsel %vm371, %v12, 0.0
  %v377 = vsel %vm371, %v13, 0.0
  %v378 = vsel %vm371, %v14, 0.0
  %v379 = vsel %vm371, %v15, 0.0
  %v380 = vsel %vm371, %v16, 0.0
  %v381 = vsel %vm371, %v17, 0.0
  %v382 = vsel %vm371, %v18, 0.0
  %v383 = vsel %vm371, %v19, 0.0
  %v384 = vsel %vm371, %v20, 0.0
  %v385 = vsel %vm371, %v21, 0.0
  %v386 = vsel %vm371, %v22, 0.0
  %v387 = vsel %vm371, %v23, 0.0
  %v388 = vsel %vm371, %v24, 0.0
  %v389 = vsel %vm371, %v25, 0.0
  %v390 = vsel %vm371, %v26, 0.0
  %v391 = vsel %vm371, %v27, 0.0
  %v392 = vsel %vm371, %v28, 0.0
  %v393 = vsel %vm371, %v29, 0.0
  %v394 = vsel %vm371, %v30, 0.0
  %v395 = vsel %vm371, %v31, 0.0
  %v396 = vsel %vm371, %v32, 0.0
  %v397 = vsel %vm371, %v33, 0.0
  %v398 = vsel %vm371, %v34, 0.0
  %v399 = vsel %vm371, %v35, 0.0
  %v400 = vsel %vm371, %v36, 0.0
  %v401 = vsel %vm371, %v37, 0.0
  %v402 = vsel %vm371, %v38, 0.0
  %v403 = vsel %vm371, %v39, 0.0
  %404 = vadd.xlane.f32.xlu0 %v372
  %v405 = vpop.xlane.xlu0 %404
  %406 = vadd.xlane.f32.xlu0 %v373
  %v407 = vpop.xlane.xlu0 %406
  %408 = vadd.xlane.f32.xlu0 %v374
  %v409 = vpop.xlane.xlu0 %408
  %410 = vadd.xlane.f32.xlu0 %v375
  %v411 = vpop.xlane.xlu0 %410
  %412 = vadd.xlane.f32.xlu0 %v376
  %v413 = vpop.xlane.xlu0 %412
  %414 = vadd.xlane.f32.xlu0 %v377
  %v415 = vpop.xlane.xlu0 %414
  %416 = vadd.xlane.f32.xlu0 %v378
  %v417 = vpop.xlane.xlu0 %416
  %418 = vadd.xlane.f32.xlu0 %v379
  %v419 = vpop.xlane.xlu0 %418
  %420 = vadd.xlane.f32.xlu0 %v380
  %v421 = vpop.xlane.xlu0 %420
  %422 = vadd.xlane.f32.xlu0 %v381
  %v423 = vpop.xlane.xlu0 %422
  %424 = vadd.xlane.f32.xlu0 %v382
  %v425 = vpop.xlane.xlu0 %424
  %426 = vadd.xlane.f32.xlu0 %v383
  %v427 = vpop.xlane.xlu0 %426
  %428 = vadd.xlane.f32.xlu0 %v384
  %v429 = vpop.xlane.xlu0 %428
  %430 = vadd.xlane.f32.xlu0 %v385
  %v431 = vpop.xlane.xlu0 %430
  %432 = vadd.xlane.f32.xlu0 %v386
  %v433 = vpop.xlane.xlu0 %432
  %434 = vadd.xlane.f32.xlu0 %v387
  %v435 = vpop.xlane.xlu0 %434
  %436 = vadd.xlane.f32.xlu0 %v388
  %v437 = vpop.xlane.xlu0 %436
  %438 = vadd.xlane.f32.xlu0 %v389
  %v439 = vpop.xlane.xlu0 %438
  %440 = vadd.xlane.f32.xlu0 %v390
  %v441 = vpop.xlane.xlu0 %440
  %442 = vadd.xlane.f32.xlu0 %v391
  %v443 = vpop.xlane.xlu0 %442
  %444 = vadd.xlane.f32.xlu0 %v392
  %v445 = vpop.xlane.xlu0 %444
  %446 = vadd.xlane.f32.xlu0 %v393
  %v447 = vpop.xlane.xlu0 %446
  %448 = vadd.xlane.f32.xlu0 %v394
  %v449 = vpop.xlane.xlu0 %448
  %450 = vadd.xlane.f32.xlu0 %v395
  %v451 = vpop.xlane.xlu0 %450
  %452 = vadd.xlane.f32.xlu0 %v396
  %v453 = vpop.xlane.xlu0 %452
  %454 = vadd.xlane.f32.xlu0 %v397
  %v455 = vpop.xlane.xlu0 %454
  %456 = vadd.xlane.f32.xlu0 %v398
  %v457 = vpop.xlane.xlu0 %456
  %458 = vadd.xlane.f32.xlu0 %v399
  %v459 = vpop.xlane.xlu0 %458
  %460 = vadd.xlane.f32.xlu0 %v400
  %v461 = vpop.xlane.xlu0 %460
  %462 = vadd.xlane.f32.xlu0 %v401
  %v463 = vpop.xlane.xlu0 %462
  %464 = vadd.xlane.f32.xlu0 %v402
  %v465 = vpop.xlane.xlu0 %464
  %466 = vadd.xlane.f32.xlu0 %v403
  %v467 = vpop.xlane.xlu0 %466
  %v468 = vmul.f32 %v405, 0.015625
  %v469 = vmul.f32 %v407, 0.015625
  %v470 = vmul.f32 %v409, 0.015625
  %v471 = vmul.f32 %v411, 0.015625
  %v472 = vmul.f32 %v413, 0.015625
  %v473 = vmul.f32 %v415, 0.015625
  %v474 = vmul.f32 %v417, 0.015625
  %v475 = vmul.f32 %v419, 0.015625
  %v476 = vmul.f32 %v421, 0.015625
  %v477 = vmul.f32 %v423, 0.015625
  %v478 = vmul.f32 %v425, 0.015625
  %v479 = vmul.f32 %v427, 0.015625
  %v480 = vmul.f32 %v429, 0.015625
  %v481 = vmul.f32 %v431, 0.015625
  %v482 = vmul.f32 %v433, 0.015625
  %v483 = vmul.f32 %v435, 0.015625
  %v484 = vmul.f32 %v437, 0.015625
  %v485 = vmul.f32 %v439, 0.015625
  %v486 = vmul.f32 %v441, 0.015625
  %v487 = vmul.f32 %v443, 0.015625
  %v488 = vmul.f32 %v445, 0.015625
  %v489 = vmul.f32 %v447, 0.015625
  %v490 = vmul.f32 %v449, 0.015625
  %v491 = vmul.f32 %v451, 0.015625
  %v492 = vmul.f32 %v453, 0.015625
  %v493 = vmul.f32 %v455, 0.015625
  %v494 = vmul.f32 %v457, 0.015625
  %v495 = vmul.f32 %v459, 0.015625
  %v496 = vmul.f32 %v461, 0.015625
  %v497 = vmul.f32 %v463, 0.015625
  %v498 = vmul.f32 %v465, 0.015625
  %v499 = vmul.f32 %v467, 0.015625
  %v500 = vmul.f32 %v372, %v372
  %v501 = vmul.f32 %v373, %v373
  %v502 = vmul.f32 %v374, %v374
  %v503 = vmul.f32 %v375, %v375
  %v504 = vmul.f32 %v376, %v376
  %v505 = vmul.f32 %v377, %v377
  %v506 = vmul.f32 %v378, %v378
  %v507 = vmul.f32 %v379, %v379
  %v508 = vmul.f32 %v380, %v380
  %v509 = vmul.f32 %v381, %v381
  %v510 = vmul.f32 %v382, %v382
  %v511 = vmul.f32 %v383, %v383
  %v512 = vmul.f32 %v384, %v384
  %v513 = vmul.f32 %v385, %v385
  %v514 = vmul.f32 %v386, %v386
  %v515 = vmul.f32 %v387, %v387
  %v516 = vmul.f32 %v388, %v388
  %v517 = vmul.f32 %v389, %v389
  %v518 = vmul.f32 %v390, %v390
  %v519 = vmul.f32 %v391, %v391
  %v520 = vmul.f32 %v392, %v392
  %v521 = vmul.f32 %v393, %v393
  %v522 = vmul.f32 %v394, %v394
  %v523 = vmul.f32 %v395, %v395
  %v524 = vmul.f32 %v396, %v396
  %v525 = vmul.f32 %v397, %v397
  %v526 = vmul.f32 %v398, %v398
  %v527 = vmul.f32 %v399, %v399
  %v528 = vmul.f32 %v400, %v400
  %v529 = vmul.f32 %v401, %v401
  %v530 = vmul.f32 %v402, %v402
  %v531 = vmul.f32 %v403, %v403
  %532 = vadd.xlane.f32.xlu0 %v500
  %v533 = vpop.xlane.xlu0 %532
  %534 = vadd.xlane.f32.xlu0 %v501
  %v535 = vpop.xlane.xlu0 %534
  %536 = vadd.xlane.f32.xlu0 %v502
  %v537 = vpop.xlane.xlu0 %536
  %538 = vadd.xlane.f32.xlu0 %v503
  %v539 = vpop.xlane.xlu0 %538
  %540 = vadd.xlane.f32.xlu0 %v504
  %v541 = vpop.xlane.xlu0 %540
  %542 = vadd.xlane.f32.xlu0 %v505
  %v543 = vpop.xlane.xlu0 %542
  %544 = vadd.xlane.f32.xlu0 %v506
  %v545 = vpop.xlane.xlu0 %544
  %546 = vadd.xlane.f32.xlu0 %v507
  %v547 = vpop.xlane.xlu0 %546
  %548 = vadd.xlane.f32.xlu0 %v508
  %v549 = vpop.xlane.xlu0 %548
  %550 = vadd.xlane.f32.xlu0 %v509
  %v551 = vpop.xlane.xlu0 %550
  %552 = vadd.xlane.f32.xlu0 %v510
  %v553 = vpop.xlane.xlu0 %552
  %554 = vadd.xlane.f32.xlu0 %v511
  %v555 = vpop.xlane.xlu0 %554
  %556 = vadd.xlane.f32.xlu0 %v512
  %v557 = vpop.xlane.xlu0 %556
  %558 = vadd.xlane.f32.xlu0 %v513
  %v559 = vpop.xlane.xlu0 %558
  %560 = vadd.xlane.f32.xlu0 %v514
  %v561 = vpop.xlane.xlu0 %560
  %562 = vadd.xlane.f32.xlu0 %v515
  %v563 = vpop.xlane.xlu0 %562
  %564 = vadd.xlane.f32.xlu0 %v516
  %v565 = vpop.xlane.xlu0 %564
  %566 = vadd.xlane.f32.xlu0 %v517
  %v567 = vpop.xlane.xlu0 %566
  %568 = vadd.xlane.f32.xlu0 %v518
  %v569 = vpop.xlane.xlu0 %568
  %570 = vadd.xlane.f32.xlu0 %v519
  %v571 = vpop.xlane.xlu0 %570
  %572 = vadd.xlane.f32.xlu0 %v520
  %v573 = vpop.xlane.xlu0 %572
  %574 = vadd.xlane.f32.xlu0 %v521
  %v575 = vpop.xlane.xlu0 %574
  %576 = vadd.xlane.f32.xlu0 %v522
  %v577 = vpop.xlane.xlu0 %576
  %578 = vadd.xlane.f32.xlu0 %v523
  %v579 = vpop.xlane.xlu0 %578
  %580 = vadd.xlane.f32.xlu0 %v524
  %v581 = vpop.xlane.xlu0 %580
  %582 = vadd.xlane.f32.xlu0 %v525
  %v583 = vpop.xlane.xlu0 %582
  %584 = vadd.xlane.f32.xlu0 %v526
  %v585 = vpop.xlane.xlu0 %584
  %586 = vadd.xlane.f32.xlu0 %v527
  %v587 = vpop.xlane.xlu0 %586
  %588 = vadd.xlane.f32.xlu0 %v528
  %v589 = vpop.xlane.xlu0 %588
  %590 = vadd.xlane.f32.xlu0 %v529
  %v591 = vpop.xlane.xlu0 %590
  %592 = vadd.xlane.f32.xlu0 %v530
  %v593 = vpop.xlane.xlu0 %592
  %594 = vadd.xlane.f32.xlu0 %v531
  %v595 = vpop.xlane.xlu0 %594
  %v596 = vmul.f32 %v533, 0.015625
  %v597 = vmul.f32 %v535, 0.015625
  %v598 = vmul.f32 %v537, 0.015625
  %v599 = vmul.f32 %v539, 0.015625
  %v600 = vmul.f32 %v541, 0.015625
  %v601 = vmul.f32 %v543, 0.015625
  %v602 = vmul.f32 %v545, 0.015625
  %v603 = vmul.f32 %v547, 0.015625
  %v604 = vmul.f32 %v549, 0.015625
  %v605 = vmul.f32 %v551, 0.015625
  %v606 = vmul.f32 %v553, 0.015625
  %v607 = vmul.f32 %v555, 0.015625
  %v608 = vmul.f32 %v557, 0.015625
  %v609 = vmul.f32 %v559, 0.015625
  %v610 = vmul.f32 %v561, 0.015625
  %v611 = vmul.f32 %v563, 0.015625
  %v612 = vmul.f32 %v565, 0.015625
  %v613 = vmul.f32 %v567, 0.015625
  %v614 = vmul.f32 %v569, 0.015625
  %v615 = vmul.f32 %v571, 0.015625
  %v616 = vmul.f32 %v573, 0.015625
  %v617 = vmul.f32 %v575, 0.015625
  %v618 = vmul.f32 %v577, 0.015625
  %v619 = vmul.f32 %v579, 0.015625
  %v620 = vmul.f32 %v581, 0.015625
  %v621 = vmul.f32 %v583, 0.015625
  %v622 = vmul.f32 %v585, 0.015625
  %v623 = vmul.f32 %v587, 0.015625
  %v624 = vmul.f32 %v589, 0.015625
  %v625 = vmul.f32 %v591, 0.015625
  %v626 = vmul.f32 %v593, 0.015625
  %v627 = vmul.f32 %v595, 0.015625
  %v628 = vsel %vm371, %v468, %v303
  %v629 = vsel %vm371, %v469, %v304
  %v630 = vsel %vm371, %v470, %v305
  %v631 = vsel %vm371, %v471, %v306
  %v632 = vsel %vm371, %v472, %v307
  %v633 = vsel %vm371, %v473, %v308
  %v634 = vsel %vm371, %v474, %v309
  %v635 = vsel %vm371, %v475, %v310
  %v636 = vsel %vm371, %v476, %v311
  %v637 = vsel %vm371, %v477, %v312
  %v638 = vsel %vm371, %v478, %v313
  %v639 = vsel %vm371, %v479, %v314
  %v640 = vsel %vm371, %v480, %v315
  %v641 = vsel %vm371, %v481, %v316
  %v642 = vsel %vm371, %v482, %v317
  %v643 = vsel %vm371, %v483, %v318
  %v644 = vsel %vm371, %v484, %v319
  %v645 = vsel %vm371, %v485, %v320
  %v646 = vsel %vm371, %v486, %v321
  %v647 = vsel %vm371, %v487, %v322
  %v648 = vsel %vm371, %v488, %v323
  %v649 = vsel %vm371, %v489, %v324
  %v650 = vsel %vm371, %v490, %v325
  %v651 = vsel %vm371, %v491, %v326
  %v652 = vsel %vm371, %v492, %v327
  %v653 = vsel %vm371, %v493, %v328
  %v654 = vsel %vm371, %v494, %v329
  %v655 = vsel %vm371, %v495, %v330
  %v656 = vsel %vm371, %v496, %v331
  %v657 = vsel %vm371, %v497, %v332
  %v658 = vsel %vm371, %v498, %v333
  %v659 = vsel %vm371, %v499, %v334
  %v660 = vsel %vm371, %v596, %v335
  %v661 = vsel %vm371, %v597, %v336
  %v662 = vsel %vm371, %v598, %v337
  %v663 = vsel %vm371, %v599, %v338
  %v664 = vsel %vm371, %v600, %v339
  %v665 = vsel %vm371, %v601, %v340
  %v666 = vsel %vm371, %v602, %v341
  %v667 = vsel %vm371, %v603, %v342
  %v668 = vsel %vm371, %v604, %v343
  %v669 = vsel %vm371, %v605, %v344
  %v670 = vsel %vm371, %v606, %v345
  %v671 = vsel %vm371, %v607, %v346
  %v672 = vsel %vm371, %v608, %v347
  %v673 = vsel %vm371, %v609, %v348
  %v674 = vsel %vm371, %v610, %v349
  %v675 = vsel %vm371, %v611, %v350
  %v676 = vsel %vm371, %v612, %v351
  %v677 = vsel %vm371, %v613, %v352
  %v678 = vsel %vm371, %v614, %v353
  %v679 = vsel %vm371, %v615, %v354
  %v680 = vsel %vm371, %v616, %v355
  %v681 = vsel %vm371, %v617, %v356
  %v682 = vsel %vm371, %v618, %v357
  %v683 = vsel %vm371, %v619, %v358
  %v684 = vsel %vm371, %v620, %v359
  %v685 = vsel %vm371, %v621, %v360
  %v686 = vsel %vm371, %v622, %v361
  %v687 = vsel %vm371, %v623, %v362
  %v688 = vsel %vm371, %v624, %v363
  %v689 = vsel %vm371, %v625, %v364
  %v690 = vsel %vm371, %v626, %v365
  %v691 = vsel %vm371, %v627, %v366
  %v692 = vmul.f32 %v628, %v628
  %v693 = vmul.f32 %v629, %v629
  %v694 = vmul.f32 %v630, %v630
  %v695 = vmul.f32 %v631, %v631
  %v696 = vmul.f32 %v632, %v632
  %v697 = vmul.f32 %v633, %v633
  %v698 = vmul.f32 %v634, %v634
  %v699 = vmul.f32 %v635, %v635
  %v700 = vmul.f32 %v636, %v636
  %v701 = vmul.f32 %v637, %v637
  %v702 = vmul.f32 %v638, %v638
  %v703 = vmul.f32 %v639, %v639
  %v704 = vmul.f32 %v640, %v640
  %v705 = vmul.f32 %v641, %v641
  %v706 = vmul.f32 %v642, %v642
  %v707 = vmul.f32 %v643, %v643
  %v708 = vmul.f32 %v644, %v644
  %v709 = vmul.f32 %v645, %v645
  %v710 = vmul.f32 %v646, %v646
  %v711 = vmul.f32 %v647, %v647
  %v712 = vmul.f32 %v648, %v648
  %v713 = vmul.f32 %v649, %v649
  %v714 = vmul.f32 %v650, %v650
  %v715 = vmul.f32 %v651, %v651
  %v716 = vmul.f32 %v652, %v652
  %v717 = vmul.f32 %v653, %v653
  %v718 = vmul.f32 %v654, %v654
  %v719 = vmul.f32 %v655, %v655
  %v720 = vmul.f32 %v656, %v656
  %v721 = vmul.f32 %v657, %v657
  %v722 = vmul.f32 %v658, %v658
  %v723 = vmul.f32 %v659, %v659
  %v724 = vsub.f32 %v660, %v692
  %v725 = vsub.f32 %v661, %v693
  %v726 = vsub.f32 %v662, %v694
  %v727 = vsub.f32 %v663, %v695
  %v728 = vsub.f32 %v664, %v696
  %v729 = vsub.f32 %v665, %v697
  %v730 = vsub.f32 %v666, %v698
  %v731 = vsub.f32 %v667, %v699
  %v732 = vsub.f32 %v668, %v700
  %v733 = vsub.f32 %v669, %v701
  %v734 = vsub.f32 %v670, %v702
  %v735 = vsub.f32 %v671, %v703
  %v736 = vsub.f32 %v672, %v704
  %v737 = vsub.f32 %v673, %v705
  %v738 = vsub.f32 %v674, %v706
  %v739 = vsub.f32 %v675, %v707
  %v740 = vsub.f32 %v676, %v708
  %v741 = vsub.f32 %v677, %v709
  %v742 = vsub.f32 %v678, %v710
  %v743 = vsub.f32 %v679, %v711
  %v744 = vsub.f32 %v680, %v712
  %v745 = vsub.f32 %v681, %v713
  %v746 = vsub.f32 %v682, %v714
  %v747 = vsub.f32 %v683, %v715
  %v748 = vsub.f32 %v684, %v716
  %v749 = vsub.f32 %v685, %v717
  %v750 = vsub.f32 %v686, %v718
  %v751 = vsub.f32 %v687, %v719
  %v752 = vsub.f32 %v688, %v720
  %v753 = vsub.f32 %v689, %v721
  %v754 = vsub.f32 %v690, %v722
  %v755 = vsub.f32 %v691, %v723
  %v756 = vmax.f32 %v724, 0.0
  %v757 = vmax.f32 %v725, 0.0
  %v758 = vmax.f32 %v726, 0.0
  %v759 = vmax.f32 %v727, 0.0
  %v760 = vmax.f32 %v728, 0.0
  %v761 = vmax.f32 %v729, 0.0
  %v762 = vmax.f32 %v730, 0.0
  %v763 = vmax.f32 %v731, 0.0
  %v764 = vmax.f32 %v732, 0.0
  %v765 = vmax.f32 %v733, 0.0
  %v766 = vmax.f32 %v734, 0.0
  %v767 = vmax.f32 %v735, 0.0
  %v768 = vmax.f32 %v736, 0.0
  %v769 = vmax.f32 %v737, 0.0
  %v770 = vmax.f32 %v738, 0.0
  %v771 = vmax.f32 %v739, 0.0
  %v772 = vmax.f32 %v740, 0.0
  %v773 = vmax.f32 %v741, 0.0
  %v774 = vmax.f32 %v742, 0.0
  %v775 = vmax.f32 %v743, 0.0
  %v776 = vmax.f32 %v744, 0.0
  %v777 = vmax.f32 %v745, 0.0
  %v778 = vmax.f32 %v746, 0.0
  %v779 = vmax.f32 %v747, 0.0
  %v780 = vmax.f32 %v748, 0.0
  %v781 = vmax.f32 %v749, 0.0
  %v782 = vmax.f32 %v750, 0.0
  %v783 = vmax.f32 %v751, 0.0
  %v784 = vmax.f32 %v752, 0.0
  %v785 = vmax.f32 %v753, 0.0
  %v786 = vmax.f32 %v754, 0.0
  %v787 = vmax.f32 %v755, 0.0
  %v788 = vsub.f32 %v8, %v628
  %v789 = vsub.f32 %v9, %v629
  %v790 = vsub.f32 %v10, %v630
  %v791 = vsub.f32 %v11, %v631
  %v792 = vsub.f32 %v12, %v632
  %v793 = vsub.f32 %v13, %v633
  %v794 = vsub.f32 %v14, %v634
  %v795 = vsub.f32 %v15, %v635
  %v796 = vsub.f32 %v16, %v636
  %v797 = vsub.f32 %v17, %v637
  %v798 = vsub.f32 %v18, %v638
  %v799 = vsub.f32 %v19, %v639
  %v800 = vsub.f32 %v20, %v640
  %v801 = vsub.f32 %v21, %v641
  %v802 = vsub.f32 %v22, %v642
  %v803 = vsub.f32 %v23, %v643
  %v804 = vsub.f32 %v24, %v644
  %v805 = vsub.f32 %v25, %v645
  %v806 = vsub.f32 %v26, %v646
  %v807 = vsub.f32 %v27, %v647
  %v808 = vsub.f32 %v28, %v648
  %v809 = vsub.f32 %v29, %v649
  %v810 = vsub.f32 %v30, %v650
  %v811 = vsub.f32 %v31, %v651
  %v812 = vsub.f32 %v32, %v652
  %v813 = vsub.f32 %v33, %v653
  %v814 = vsub.f32 %v34, %v654
  %v815 = vsub.f32 %v35, %v655
  %v816 = vsub.f32 %v36, %v656
  %v817 = vsub.f32 %v37, %v657
  %v818 = vsub.f32 %v38, %v658
  %v819 = vsub.f32 %v39, %v659
  %v820 = vadd.f32 %v756, 1e-05
  %v821 = vadd.f32 %v757, 1e-05
  %v822 = vadd.f32 %v758, 1e-05
  %v823 = vadd.f32 %v759, 1e-05
  %v824 = vadd.f32 %v760, 1e-05
  %v825 = vadd.f32 %v761, 1e-05
  %v826 = vadd.f32 %v762, 1e-05
  %v827 = vadd.f32 %v763, 1e-05
  %v828 = vadd.f32 %v764, 1e-05
  %v829 = vadd.f32 %v765, 1e-05
  %v830 = vadd.f32 %v766, 1e-05
  %v831 = vadd.f32 %v767, 1e-05
  %v832 = vadd.f32 %v768, 1e-05
  %v833 = vadd.f32 %v769, 1e-05
  %v834 = vadd.f32 %v770, 1e-05
  %v835 = vadd.f32 %v771, 1e-05
  %v836 = vadd.f32 %v772, 1e-05
  %v837 = vadd.f32 %v773, 1e-05
  %v838 = vadd.f32 %v774, 1e-05
  %v839 = vadd.f32 %v775, 1e-05
  %v840 = vadd.f32 %v776, 1e-05
  %v841 = vadd.f32 %v777, 1e-05
  %v842 = vadd.f32 %v778, 1e-05
  %v843 = vadd.f32 %v779, 1e-05
  %v844 = vadd.f32 %v780, 1e-05
  %v845 = vadd.f32 %v781, 1e-05
  %v846 = vadd.f32 %v782, 1e-05
  %v847 = vadd.f32 %v783, 1e-05
  %v848 = vadd.f32 %v784, 1e-05
  %v849 = vadd.f32 %v785, 1e-05
  %v850 = vadd.f32 %v786, 1e-05
  %v851 = vadd.f32 %v787, 1e-05
  %v852 = vrsqrt.pop %v820
  %v853 = vrsqrt.pop %v821
  %v854 = vrsqrt.pop %v822
  %v855 = vrsqrt.pop %v823
  %v856 = vrsqrt.pop %v824
  %v857 = vrsqrt.pop %v825
  %v858 = vrsqrt.pop %v826
  %v859 = vrsqrt.pop %v827
  %v860 = vrsqrt.pop %v828
  %v861 = vrsqrt.pop %v829
  %v862 = vrsqrt.pop %v830
  %v863 = vrsqrt.pop %v831
  %v864 = vrsqrt.pop %v832
  %v865 = vrsqrt.pop %v833
  %v866 = vrsqrt.pop %v834
  %v867 = vrsqrt.pop %v835
  %v868 = vrsqrt.pop %v836
  %v869 = vrsqrt.pop %v837
  %v870 = vrsqrt.pop %v838
  %v871 = vrsqrt.pop %v839
  %v872 = vrsqrt.pop %v840
  %v873 = vrsqrt.pop %v841
  %v874 = vrsqrt.pop %v842
  %v875 = vrsqrt.pop %v843
  %v876 = vrsqrt.pop %v844
  %v877 = vrsqrt.pop %v845
  %v878 = vrsqrt.pop %v846
  %v879 = vrsqrt.pop %v847
  %v880 = vrsqrt.pop %v848
  %v881 = vrsqrt.pop %v849
  %v882 = vrsqrt.pop %v850
  %v883 = vrsqrt.pop %v851
  %v884 = vmul.f32 %v788, %v852
  %v885 = vmul.f32 %v789, %v853
  %v886 = vmul.f32 %v790, %v854
  %v887 = vmul.f32 %v791, %v855
  %v888 = vmul.f32 %v792, %v856
  %v889 = vmul.f32 %v793, %v857
  %v890 = vmul.f32 %v794, %v858
  %v891 = vmul.f32 %v795, %v859
  %v892 = vmul.f32 %v796, %v860
  %v893 = vmul.f32 %v797, %v861
  %v894 = vmul.f32 %v798, %v862
  %v895 = vmul.f32 %v799, %v863
  %v896 = vmul.f32 %v800, %v864
  %v897 = vmul.f32 %v801, %v865
  %v898 = vmul.f32 %v802, %v866
  %v899 = vmul.f32 %v803, %v867
  %v900 = vmul.f32 %v804, %v868
  %v901 = vmul.f32 %v805, %v869
  %v902 = vmul.f32 %v806, %v870
  %v903 = vmul.f32 %v807, %v871
  %v904 = vmul.f32 %v808, %v872
  %v905 = vmul.f32 %v809, %v873
  %v906 = vmul.f32 %v810, %v874
  %v907 = vmul.f32 %v811, %v875
  %v908 = vmul.f32 %v812, %v876
  %v909 = vmul.f32 %v813, %v877
  %v910 = vmul.f32 %v814, %v878
  %v911 = vmul.f32 %v815, %v879
  %v912 = vmul.f32 %v816, %v880
  %v913 = vmul.f32 %v817, %v881
  %v914 = vmul.f32 %v818, %v882
  %v915 = vmul.f32 %v819, %v883
  %916 = vst [vmem:[%s1] sm:$0xff] %v884
  %917 = vst [vmem:[%s1 + $0x8] sm:$0xff] %v885
  %918 = vst [vmem:[%s1 + $0x10] sm:$0xff] %v886
  %919 = vst [vmem:[%s1 + $0x18] sm:$0xff] %v887
  %920 = vst [vmem:[%s1 + $0x20] sm:$0xff] %v888
  %921 = vst [vmem:[%s1 + $0x28] sm:$0xff] %v889
  %922 = vst [vmem:[%s1 + $0x30] sm:$0xff] %v890
  %923 = vst [vmem:[%s1 + $0x38] sm:$0xff] %v891
  %924 = vst [vmem:[%s1 + $0x40] sm:$0xff] %v892
  %925 = vst [vmem:[%s1 + $0x48] sm:$0xff] %v893
  %926 = vst [vmem:[%s1 + $0x50] sm:$0xff] %v894
  %927 = vst [vmem:[%s1 + $0x58] sm:$0xff] %v895
  %928 = vst [vmem:[%s1 + $0x60] sm:$0xff] %v896
  %929 = vst [vmem:[%s1 + $0x68] sm:$0xff] %v897
  %930 = vst [vmem:[%s1 + $0x70] sm:$0xff] %v898
  %931 = vst [vmem:[%s1 + $0x78] sm:$0xff] %v899
  %932 = vst [vmem:[%s1 + $0x80] sm:$0xff] %v900
  %933 = vst [vmem:[%s1 + $0x88] sm:$0xff] %v901
  %934 = vst [vmem:[%s1 + $0x90] sm:$0xff] %v902
  %935 = vst [vmem:[%s1 + $0x98] sm:$0xff] %v903
  %936 = vst [vmem:[%s1 + $0xa0] sm:$0xff] %v904
  %937 = vst [vmem:[%s1 + $0xa8] sm:$0xff] %v905
  %938 = vst [vmem:[%s1 + $0xb0] sm:$0xff] %v906
  %939 = vst [vmem:[%s1 + $0xb8] sm:$0xff] %v907
  %940 = vst [vmem:[%s1 + $0xc0] sm:$0xff] %v908
  %941 = vst [vmem:[%s1 + $0xc8] sm:$0xff] %v909
  %942 = vst [vmem:[%s1 + $0xd0] sm:$0xff] %v910
  %943 = vst [vmem:[%s1 + $0xd8] sm:$0xff] %v911
  %944 = vst [vmem:[%s1 + $0xe0] sm:$0xff] %v912
  %945 = vst [vmem:[%s1 + $0xe8] sm:$0xff] %v913
  %946 = vst [vmem:[%s1 + $0xf0] sm:$0xff] %v914
  %947 = vst [vmem:[%s1 + $0xf8] sm:$0xff] %v915
  // Predicated region
  $region6: #{generic_hoi_network_forward.3} parent=0 // pred_check
    _
  $region7: #{generic_hoi_network_forward.3} parent=0 // pred_check_branch
    %949 = sbr.rel (0) target = $region9
  $region8: #{generic_hoi_network_forward.3} parent=0 // pred_region
    _
  $region9: #{generic_hoi_network_forward.3} parent=0 // pred_fallthru
    _
  // Predicated region
  $region10: #{generic_hoi_network_forward.3} parent=0 // pred_check
    _
  $region11: #{generic_hoi_network_forward.3} parent=0 // pred_check_branch
    %951 = sbr.rel (0) target = $region13
  $region12: #{generic_hoi_network_forward.3} parent=0 // pred_region
    _
  $region13: #{generic_hoi_network_forward.3} parent=0 // pred_fallthru
    _

// kernel: generic_hoi_network_forward.2
$region0: #{generic_hoi_network_forward.2}
  #allocation0 [shape = 'u32[]', space=smem, size = 0x4, offset = 0x4, fixed_abs, tag = 'smem constant byte address 0x4 - core index']
  #allocation1 [shape = 'u32[144,128]{1,0:T(1,128)}', space=vmem, size = 0x12000, scoped, tag = 'internal scratch']
  %s0 = inlined_call_operand.vmem [shape: f32[6,256], index: 0, kind: input, shape index: {}]
  %s1 = inlined_call_operand.vmem [shape: f32[6,1], index: 1, kind: input, shape index: {}]
  %s2 = inlined_call_operand.vmem [shape: f32[6,1], index: 2, kind: input, shape index: {}]
  %s3 = inlined_call_operand.vmem [shape: f32[6,256], index: 3, kind: output, shape index: {}]
  %s4 = sld [smem:[#allocation0]]
  $region22: #{generic_hoi_network_forward.2} parent=0
    _
  %s6 = ssub.s32 1, %s4
  %s7 = scalar_select 0, %s6, %s4
  // Predicated region
  $region2: #{generic_hoi_network_forward.2} parent=0 // pred_check
    _
  $region3: #{generic_hoi_network_forward.2} parent=0 // pred_check_branch
    %9 = sbr.rel (0) target = $region5
  $region4: #{generic_hoi_network_forward.2} parent=0 // pred_region
    _
  $region5: #{generic_hoi_network_forward.2} parent=0 // pred_fallthru
    _
  // Predicated region
  $region6: #{generic_hoi_network_forward.2} parent=0 // pred_check
    _
  $region7: #{generic_hoi_network_forward.2} parent=0 // pred_check_branch
    %11 = sbr.rel (0) target = $region9
  $region8: #{generic_hoi_network_forward.2} parent=0 // pred_region
    _
  $region9: #{generic_hoi_network_forward.2} parent=0 // pred_fallthru
    _
  // Predicated region
  $region10: #{generic_hoi_network_forward.2} parent=0 // pred_check
    _
  $region11: #{generic_hoi_network_forward.2} parent=0 // pred_check_branch
    %13 = sbr.rel (0) target = $region13
  $region12: #{generic_hoi_network_forward.2} parent=0 // pred_region
    _
  $region13: #{generic_hoi_network_forward.2} parent=0 // pred_fallthru
    _
  %v14 = vld [vmem:[%s0] sm:$0x3f]
  %v15 = vld [vmem:[%s0 + $0x8] sm:$0x3f]
  %v16 = vld [vmem:[%s1] sm:$0x3f]
  %18 = vset.pattern.permute.xlu0 0
  %19 = vperm.xlu0 %18, %v16
  %v20 = vpop.permute.xlu0 %19
  %v22 = vmul.f32 %v14, %v20
  %v23 = vmul.f32 %v15, %v20
  %v24 = vld [vmem:[%s2] sm:$0x3f]
  %26 = vset.pattern.permute.xlu0 0
  %27 = vperm.xlu0 %26, %v24
  %v28 = vpop.permute.xlu0 %27
  %v30 = vadd.f32 %v22, %v28
  %v31 = vadd.f32 %v23, %v28
  %32 = vst [vmem:[%s3] sm:$0x3f] %v30
  %33 = vst [vmem:[%s3 + $0x8] sm:$0x3f] %v31
  // Predicated region
  $region14: #{generic_hoi_network_forward.2} parent=0 // pred_check
    _
  $region15: #{generic_hoi_network_forward.2} parent=0 // pred_check_branch
    %35 = sbr.rel (0) target = $region17
  $region16: #{generic_hoi_network_forward.2} parent=0 // pred_region
    _
  $region17: #{generic_hoi_network_forward.2} parent=0 // pred_fallthru
    _
  // Predicated region
  $region18: #{generic_hoi_network_forward.2} parent=0 // pred_check
    _
  $region19: #{generic_hoi_network_forward.2} parent=0 // pred_check_branch
    %37 = sbr.rel (0) target = $region21
  $region20: #{generic_hoi_network_forward.2} parent=0 // pred_region
    _
  $region21: #{generic_hoi_network_forward.2} parent=0 // pred_fallthru
    _

</llo_original>
